<compile_context>
chip_gen: v6e
topology: v6e:2x2x1
jax: 0.10.0
libtpu: 0.0.40
codegen_flags: <defaults>
</compile_context>

<pallas_src>
import jax
import jax.numpy as jnp
from jax import lax
from jax.experimental import pallas as pl
from jax.experimental.pallas import tpu as pltpu


_LANE = 128
_SUBLANE = 8
_F32_BYTES = 4

# Conservative cross-generation budgets: the per-step working set must fit the
# smallest VMEM we target (v7x: 64 MiB physical / 32 MiB scoped default; v5e
# scoped default is 16 MiB, hence the explicit limit below).
_VMEM_BLOCK_BUDGET = 20 * 1024 * 1024
_VMEM_LIMIT_BYTES = 40 * 1024 * 1024


def _round_up(n, m):
    return ((n + m - 1) // m) * m


def _pick_block_b(B, S, Hp):
    """Pick the batch block Bt from a VMEM working-set budget.

    Prefers the smallest Bt that already gives the MXU >= 256 rows per grid
    step while leaving >= 2 grid steps (so both v7x TensorCores can get work);
    otherwise takes the largest Bt that fits (one big step beats many
    overhead-dominated tiny steps on single-TC v5e/v6e).
    """
    # Invariant operands (double-buffered by the pipeline).
    fixed = 2 * (Hp * 3 * Hp + 3 * Hp) * _F32_BYTES
    # Per-batch-element footprint of one grid step: double-buffered x / out
    # blocks plus every f32 intermediate the kernel materializes.
    per_b = (2 * S * Hp          # x block (double buffered)
             + 2 * S * Hp        # out block (double buffered)
             + 3 * S * Hp        # fused qkv projection
             + 3 * S * Hp        # q / k / v after the split
             + 2 * S * S         # scores + exp(scores)
             + S * Hp            # attention result before the store
             ) * _F32_BYTES

    candidates = [
        d for d in range(1, B + 1)
        if B % d == 0
        and (d == B or (d * S) % _SUBLANE == 0)      # (8, 128) block rule
        and fixed + d * per_b <= _VMEM_BLOCK_BUDGET
    ]
    if not candidates:
        return 1
    good = [d for d in candidates if d * S >= 256 and B // d >= 2]
    if good:
        return min(good)
    return max(candidates)


def _attention_kernel(block_b, S, Hp):
    def kernel(x_ref, wqkv_ref, bqkv_ref, o_ref):
        x = x_ref[...]                          # (Bt*S, Hp), lane-dense
        w = wqkv_ref[...]                       # (Hp, 3*Hp), pre-T, q-scaled
        b = bqkv_ref[...]                       # (1, 3*Hp)

        # Fused Q/K/V projection: a single 2-D MXU matmul with N = 3*Hp.
        qkv = jnp.dot(x, w, preferred_element_type=jnp.float32) + b

        # Slices start at lane-tile-aligned offsets 0 / Hp / 2*Hp; the split
        # reshape is tile-aligned (Hp % 128 == 0, rows are a multiple of 8 or
        # the full extent), so no relayout copies.
        query = qkv[:, 0:Hp].reshape(block_b, S, Hp)       # already * (1/H)
        keys = qkv[:, Hp:2 * Hp].reshape(block_b, S, Hp)
        value = qkv[:, 2 * Hp:3 * Hp].reshape(block_b, S, Hp)

        # Batched NT scores (contract last dims directly; no transpose).
        scores = lax.dot_general(
            query, keys,
            dimension_numbers=(((2,), (2,)), ((0,), (0,))),
            preferred_element_type=jnp.float32)            # (Bt, Sq, Sk)

        # torch Softmax(dim=1) == softmax over the query-row axis (axis 1).
        m = jnp.max(scores, axis=1, keepdims=True)
        e = jnp.exp(scores - m)
        denom = jnp.sum(e, axis=1, keepdims=True)
        wgt = e * pl.reciprocal(denom, approx=True)        # EUP vrcp, free slot

        # (Bt, Sq, Sk) @ (Bt, Sk, Hp) -> (Bt, Sq, Hp), lane-dense store.
        out = lax.dot_general(
            wgt, value,
            dimension_numbers=(((2,), (1,)), ((0,), (0,))),
            preferred_element_type=jnp.float32)
        o_ref[...] = out

    return kernel


def attention_forward(x, wk, bk, wq, bq, wv, bv):
    """x: (B, S, H) f32; weights (H, H) and biases (H,) in PyTorch layout."""
    B, S, H = x.shape
    Hp = _round_up(H, _LANE)
    scale = 1.0 / float(H)                      # == 1 / sqrt(H * H)

    # Host-side (free) layout plumbing: transpose weights to (in, out),
    # zero-pad the hidden dim to Hp (keeps the math exact), fuse Q/K/V into a
    # single (Hp, 3*Hp) matrix, and fold the 1/H score scale into the query
    # projection so the kernel never scales the (S, S) score matrix.
    def pad_wt(w):
        return jnp.zeros((Hp, Hp), jnp.float32).at[:H, :H].set(w.T)

    def pad_b(b):
        return jnp.zeros((Hp,), jnp.float32).at[:H].set(b)

    wqkv = jnp.concatenate(
        [pad_wt(wq) * scale, pad_wt(wk), pad_wt(wv)], axis=1)       # (Hp, 3Hp)
    bqkv = jnp.concatenate(
        [pad_b(bq) * scale, pad_b(bk), pad_b(bv)]).reshape(1, 3 * Hp)

    x_pad = jnp.zeros((B, S, Hp), jnp.float32).at[:, :, :H].set(x)
    x2 = x_pad.reshape(B * S, Hp)               # lane-dense 2-D kernel input

    block_b = _pick_block_b(B, S, Hp)
    grid_b = B // block_b

    out = pl.pallas_call(
        _attention_kernel(block_b, S, Hp),
        out_shape=jax.ShapeDtypeStruct((B, S, Hp), jnp.float32),
        grid_spec=pltpu.PrefetchScalarGridSpec(
            num_scalar_prefetch=0,
            grid=(grid_b,),
            in_specs=[
                pl.BlockSpec((block_b * S, Hp), lambda i: (i, 0)),
                pl.BlockSpec((Hp, 3 * Hp), lambda i: (0, 0)),
                pl.BlockSpec((1, 3 * Hp), lambda i: (0, 0)),
            ],
            out_specs=pl.BlockSpec((block_b, S, Hp), lambda i: (i, 0, 0)),
        ),
        compiler_params=pltpu.CompilerParams(
            dimension_semantics=("parallel",),
            vmem_limit_bytes=_VMEM_LIMIT_BYTES),
    )(x2, wqkv, bqkv)

    # Drop the zero-padded hidden columns (no-op when H % 128 == 0).
    return out[:, :, :H]


def attention_reference(x, wk, bk, wq, bq, wv, bv):
    """Pure-JAX reference mirroring the PyTorch forward exactly."""
    H = x.shape[-1]
    keys = jnp.einsum("bsh,oh->bso", x, wk) + bk
    query = jnp.einsum("bsh,oh->bso", x, wq) + bq
    value = jnp.einsum("bsh,oh->bso", x, wv) + bv
    scores = jnp.einsum("bqh,bkh->bqk", query, keys) / jnp.sqrt(
        jnp.float32(H * H))
    weights = jax.nn.softmax(scores, axis=1)    # torch Softmax(dim=1)
    return jnp.einsum("bqk,bkh->bqh", weights, value)


if __name__ == "__main__":
    B, S, H = 2, 8, 32

    key = jax.random.PRNGKey(0)
    k_x, k_wk, k_bk, k_wq, k_bq, k_wv, k_bv = jax.random.split(key, 7)

    # Deterministic parameter init (shapes per nn.Linear(hidden, hidden)).
    bound = 1.0 / jnp.sqrt(jnp.float32(H))
    x = jax.random.normal(k_x, (B, S, H), dtype=jnp.float32)
    wk = jax.random.uniform(k_wk, (H, H), jnp.float32, -bound, bound)
    bk = jax.random.uniform(k_bk, (H,), jnp.float32, -bound, bound)
    wq = jax.random.uniform(k_wq, (H, H), jnp.float32, -bound, bound)
    bq = jax.random.uniform(k_bq, (H,), jnp.float32, -bound, bound)
    wv = jax.random.uniform(k_wv, (H, H), jnp.float32, -bound, bound)
    bv = jax.random.uniform(k_bv, (H,), jnp.float32, -bound, bound)

    out = attention_forward(x, wk, bk, wq, bq, wv, bv)
    out = jax.block_until_ready(out)

    ref = attention_reference(x, wk, bk, wq, bq, wv, bv)
    assert out.shape == (B, S, H)
    # Tolerance covers the EUP approximate reciprocal in the softmax
    # denominator (pl.reciprocal(approx=True), ~1e-3 relative).
    assert jnp.allclose(out, ref, atol=2e-3, rtol=2e-3), "mismatch vs reference"

    print("KERNEL_OK")
</pallas_src>

<mosaic_0001>
module attributes {stable_mosaic.version = 11 : i64} {
  func.func @kernel(%arg0: i32, %arg1: memref<16x128xf32, #tpu.memory_space<vmem>>, %arg2: memref<128x384xf32, #tpu.memory_space<vmem>>, %arg3: memref<1x384xf32, #tpu.memory_space<vmem>>, %arg4: memref<2x8x128xf32, #tpu.memory_space<vmem>>) attributes {dimension_semantics = [#tpu.dimension_semantics<parallel>], iteration_bounds = array<i64: 1>, scalar_prefetch = 0 : i64, scratch_operands = 0 : i64, tpu.core_type = #tpu.core_type<tc>, window_params = [{transform_indices = @transform_0, window_bounds = array<i64: 16, 128>}, {pipeline_mode = #tpu.pipeline_mode<synchronous>, transform_indices = @transform_1, window_bounds = array<i64: 128, 384>}, {pipeline_mode = #tpu.pipeline_mode<synchronous>, transform_indices = @transform_2, window_bounds = array<i64: 1, 384>}, {transform_indices = @transform_3, window_bounds = array<i64: 2, 8, 128>}]} {
    %c0 = arith.constant 0 : index
    %c0_0 = arith.constant 0 : index
    %0 = vector.load %arg1[%c0, %c0_0] : memref<16x128xf32, #tpu.memory_space<vmem>>, vector<16x128xf32>
    %c0_1 = arith.constant 0 : index
    %c0_2 = arith.constant 0 : index
    %1 = vector.load %arg2[%c0_1, %c0_2] : memref<128x384xf32, #tpu.memory_space<vmem>>, vector<128x384xf32>
    %c0_3 = arith.constant 0 : index
    %c0_4 = arith.constant 0 : index
    %2 = vector.load %arg3[%c0_3, %c0_4] : memref<1x384xf32, #tpu.memory_space<vmem>>, vector<1x384xf32>
    %cst = arith.constant dense<0.000000e+00> : vector<16x384xf32>
    %3 = tpu.matmul %0, %1, %cst {dimension_numbers = #tpu.dot_dimension_numbers<[1], [0], [0], [1], [0, 0, 1, 1], [], []>} : vector<16x128xf32>, vector<128x384xf32>, vector<16x384xf32> -> vector<16x384xf32>
    %4 = vector.broadcast %2 : vector<1x384xf32> to vector<16x384xf32>
    %5 = arith.addf %3, %4 : vector<16x384xf32>
    %6 = vector.extract_strided_slice %5 {offsets = [0, 0], sizes = [16, 128], strides = [1, 1]} : vector<16x384xf32> to vector<16x128xf32>
    %7 = vector.shape_cast %6 : vector<16x128xf32> to vector<2x8x128xf32>
    %8 = vector.extract_strided_slice %5 {offsets = [0, 128], sizes = [16, 128], strides = [1, 1]} : vector<16x384xf32> to vector<16x128xf32>
    %9 = vector.shape_cast %8 : vector<16x128xf32> to vector<2x8x128xf32>
    %10 = vector.extract_strided_slice %5 {offsets = [0, 256], sizes = [16, 128], strides = [1, 1]} : vector<16x384xf32> to vector<16x128xf32>
    %11 = vector.shape_cast %10 : vector<16x128xf32> to vector<2x8x128xf32>
    %cst_5 = arith.constant dense<0.000000e+00> : vector<2x8x8xf32>
    %12 = tpu.matmul %7, %9, %cst_5 {dimension_numbers = #tpu.dot_dimension_numbers<[2], [2], [1], [1], [0, 0, 0, 1, 1, 1], [0], [0]>} : vector<2x8x128xf32>, vector<2x8x128xf32>, vector<2x8x8xf32> -> vector<2x8x8xf32>
    %cst_6 = arith.constant dense<0xFF800000> : vector<2x8xf32>
    %13 = vector.multi_reduction <maximumf>, %12, %cst_6 [1] : vector<2x8x8xf32> to vector<2x8xf32>
    %14 = vector.shape_cast %13 : vector<2x8xf32> to vector<2x1x8xf32>
    %15 = vector.broadcast %14 : vector<2x1x8xf32> to vector<2x8x8xf32>
    %16 = arith.subf %12, %15 : vector<2x8x8xf32>
    %17 = math.exp %16 : vector<2x8x8xf32>
    %cst_7 = arith.constant dense<0.000000e+00> : vector<2x8xf32>
    %18 = vector.multi_reduction <add>, %17, %cst_7 [1] : vector<2x8x8xf32> to vector<2x8xf32>
    %19 = vector.shape_cast %18 : vector<2x8xf32> to vector<2x1x8xf32>
    %20 = tpu.reciprocal %19 {approx = true} : vector<2x1x8xf32> -> vector<2x1x8xf32>
    %21 = vector.broadcast %20 : vector<2x1x8xf32> to vector<2x8x8xf32>
    %22 = arith.mulf %17, %21 : vector<2x8x8xf32>
    %cst_8 = arith.constant dense<0.000000e+00> : vector<2x8x128xf32>
    %23 = tpu.matmul %22, %11, %cst_8 {dimension_numbers = #tpu.dot_dimension_numbers<[2], [1], [1], [2], [0, 0, 0, 1, 1, 2], [0], [0]>} : vector<2x8x8xf32>, vector<2x8x128xf32>, vector<2x8x128xf32> -> vector<2x8x128xf32>
    %c0_9 = arith.constant 0 : index
    %c0_10 = arith.constant 0 : index
    %c0_11 = arith.constant 0 : index
    %24 = vector.load %arg4[%c0_9, %c0_10, %c0_11] : memref<2x8x128xf32, #tpu.memory_space<vmem>>, vector<2x8x128xf32>
    tpu.vector_store %arg4[%c0_9, %c0_10, %c0_11], %23 {strides = array<i32>} : memref<2x8x128xf32, #tpu.memory_space<vmem>>, vector<2x8x128xf32>,
    return
  }
  func.func @transform_0(%arg0: i32) -> (i32, i32) {
    %c0_i32 = arith.constant 0 : i32
    %c0_i32_0 = arith.constant 0 : i32
    return %arg0, %c0_i32 : i32, i32
  }
  func.func @transform_1(%arg0: i32) -> (i32, i32) {
    %c0_i32 = arith.constant 0 : i32
    %c0_i32_0 = arith.constant 0 : i32
    %c0_i32_1 = arith.constant 0 : i32
    return %c0_i32, %c0_i32_0 : i32, i32
  }
  func.func @transform_2(%arg0: i32) -> (i32, i32) {
    %c0_i32 = arith.constant 0 : i32
    %c0_i32_0 = arith.constant 0 : i32
    %c0_i32_1 = arith.constant 0 : i32
    return %c0_i32, %c0_i32_0 : i32, i32
  }
  func.func @transform_3(%arg0: i32) -> (i32, i32, i32) {
    %c0_i32 = arith.constant 0 : i32
    %c0_i32_0 = arith.constant 0 : i32
    %c0_i32_1 = arith.constant 0 : i32
    return %arg0, %c0_i32, %c0_i32_0 : i32, i32, i32
  }
}

</mosaic_0001>

<llo_original>
// kernel: tpu_custom_call.1
$region0: #{tpu_custom_call.1}
  #allocation0 [shape = 'u32[]', space=smem, size = 0x4, offset = 0x4, fixed_abs, tag = 'smem constant byte address 0x4 - core index']
  #allocation1 [shape = 'u32[144,128]{1,0:T(1,128)}', space=vmem, size = 0x12000, scoped, tag = 'internal scratch']
  %s0 = inlined_call_operand.hbm [shape: f32[16,128], index: 0, kind: input, shape index: {}]
  %s1 = inlined_call_operand.hbm [shape: f32[128,384], index: 1, kind: input, shape index: {}]
  %s2 = inlined_call_operand.vmem [shape: f32[1,384], index: 2, kind: input, shape index: {}]
  %s3 = inlined_call_operand.hbm [shape: f32[2,8,128], index: 3, kind: output, shape index: {}]
  %s4 = sld [smem:[#allocation0]]
  $region30: #{tpu_custom_call.1} parent=0
    _
  %s6 = ssub.s32 1, %s4
  %s7 = scalar_select 0, %s6, %s4
  $region1: #{tpu_custom_call.1} parent=0
    #allocation2 [shape = 'u8[8192]{0}', space=vmem, size = 0x2000, scoped, tag = 'input window, operand 0, single buffered']
    #allocation3 [shape = 's32[1]{0}', space=sflag, size = 0x4, scoped, tag = 'scoped memory for tpu_custom_call.1']
    #allocation4 [shape = 's32[1]{0}', space=sflag, size = 0x4, scoped, tag = 'scoped memory for tpu_custom_call.1']
    #allocation5 [shape = 'u8[196608]{0}', space=vmem, size = 0x30000, scoped, tag = 'input window, operand 1, single buffered']
    #allocation6 [shape = 's32[1]{0}', space=sflag, size = 0x4, scoped, tag = 'scoped memory for tpu_custom_call.1']
    #allocation7 [shape = 'u8[8192]{0}', space=vmem, size = 0x2000, scoped, tag = 'output window, operand 0, single buffered']
    %8 = vsyncpa [#allocation3], 0
    %9 = vsyncpa [#allocation6], 0
    %10 = vsyncpa [#allocation4], 0
    // Predicated region
    $region2: #{tpu_custom_call.1} parent=1 // pred_check
      _
    $region3: #{tpu_custom_call.1} parent=1 // pred_check_branch
      %12 = sbr.rel (0) target = $region5
    $region4: #{tpu_custom_call.1} parent=1 // pred_region
      %s14 = ssub.s32 256, 256
      %15 = vsyncadd [#allocation3], %s14
      %s16 = sshll.u32 [#allocation2], 4
      %s17 = int_to_ptr.vmem [resolvable:$true] %s16
      %22 = dma.hbm_to_vmem [thread:$0]  %s0, 256, %s17, [#allocation3], 128, 128, 8
    $region5: #{tpu_custom_call.1} parent=1 // pred_fallthru
      _
    // Predicated region
    $region6: #{tpu_custom_call.1} parent=1 // pred_check
      _
    $region7: #{tpu_custom_call.1} parent=1 // pred_check_branch
      %24 = sbr.rel (0) target = $region9
    $region8: #{tpu_custom_call.1} parent=1 // pred_region
      %s26 = ssub.s32 6144, 6144
      %27 = vsyncadd [#allocation6], %s26
      %s28 = sshll.u32 [#allocation5], 4
      %s29 = int_to_ptr.vmem [resolvable:$true] %s28
      %34 = dma.hbm_to_vmem [thread:$0]  %s1, 6144, %s29, [#allocation6], 384, 384, 24
    $region9: #{tpu_custom_call.1} parent=1 // pred_fallthru
      _
    // Predicated region
    $region10: #{tpu_custom_call.1} parent=1 // pred_check
      _
    $region11: #{tpu_custom_call.1} parent=1 // pred_check_branch
      %36 = sbr.rel (0) target = $region13
    $region12: #{tpu_custom_call.1} parent=1 // pred_region
      _
    $region13: #{tpu_custom_call.1} parent=1 // pred_fallthru
      _
    // Predicated region
    $region14: #{tpu_custom_call.1} parent=1 // pred_check
      _
    $region15: #{tpu_custom_call.1} parent=1 // pred_check_branch
      %38 = sbr.rel (0) target = $region17
    $region16: #{tpu_custom_call.1} parent=1 // pred_region
      %39 = dma.done [#allocation3], 256
    $region17: #{tpu_custom_call.1} parent=1 // pred_fallthru
      _
    // Predicated region
    $region18: #{tpu_custom_call.1} parent=1 // pred_check
      _
    $region19: #{tpu_custom_call.1} parent=1 // pred_check_branch
      %41 = sbr.rel (0) target = $region21
    $region20: #{tpu_custom_call.1} parent=1 // pred_region
      %42 = dma.done [#allocation6], 6144
    $region21: #{tpu_custom_call.1} parent=1 // pred_fallthru
      _
    %v43 = vld [vmem:[#allocation2] sm:$0xff]
    %v44 = vld [vmem:[#allocation2 + $0x8] sm:$0xff]
    %v45 = vld [vmem:[#allocation5] sm:$0xff]
    %v46 = vld [vmem:[#allocation5 + $0x8] sm:$0xff]
    %v47 = vld [vmem:[#allocation5 + $0x10] sm:$0xff]
    %v48 = vld [vmem:[#allocation5 + $0x18] sm:$0xff]
    %v49 = vld [vmem:[#allocation5 + $0x20] sm:$0xff]
    %v50 = vld [vmem:[#allocation5 + $0x28] sm:$0xff]
    %v51 = vld [vmem:[#allocation5 + $0x30] sm:$0xff]
    %v52 = vld [vmem:[#allocation5 + $0x38] sm:$0xff]
    %v53 = vld [vmem:[#allocation5 + $0x40] sm:$0xff]
    %v54 = vld [vmem:[#allocation5 + $0x48] sm:$0xff]
    %v55 = vld [vmem:[#allocation5 + $0x50] sm:$0xff]
    %v56 = vld [vmem:[#allocation5 + $0x58] sm:$0xff]
    %v57 = vld [vmem:[#allocation5 + $0x60] sm:$0xff]
    %v58 = vld [vmem:[#allocation5 + $0x68] sm:$0xff]
    %v59 = vld [vmem:[#allocation5 + $0x70] sm:$0xff]
    %v60 = vld [vmem:[#allocation5 + $0x78] sm:$0xff]
    %v61 = vld [vmem:[#allocation5 + $0x80] sm:$0xff]
    %v62 = vld [vmem:[#allocation5 + $0x88] sm:$0xff]
    %v63 = vld [vmem:[#allocation5 + $0x90] sm:$0xff]
    %v64 = vld [vmem:[#allocation5 + $0x98] sm:$0xff]
    %v65 = vld [vmem:[#allocation5 + $0xa0] sm:$0xff]
    %v66 = vld [vmem:[#allocation5 + $0xa8] sm:$0xff]
    %v67 = vld [vmem:[#allocation5 + $0xb0] sm:$0xff]
    %v68 = vld [vmem:[#allocation5 + $0xb8] sm:$0xff]
    %v69 = vld [vmem:[#allocation5 + $0xc0] sm:$0xff]
    %v70 = vld [vmem:[#allocation5 + $0xc8] sm:$0xff]
    %v71 = vld [vmem:[#allocation5 + $0xd0] sm:$0xff]
    %v72 = vld [vmem:[#allocation5 + $0xd8] sm:$0xff]
    %v73 = vld [vmem:[#allocation5 + $0xe0] sm:$0xff]
    %v74 = vld [vmem:[#allocation5 + $0xe8] sm:$0xff]
    %v75 = vld [vmem:[#allocation5 + $0xf0] sm:$0xff]
    %v76 = vld [vmem:[#allocation5 + $0xf8] sm:$0xff]
    %v77 = vld [vmem:[#allocation5 + $0x100] sm:$0xff]
    %v78 = vld [vmem:[#allocation5 + $0x108] sm:$0xff]
    %v79 = vld [vmem:[#allocation5 + $0x110] sm:$0xff]
    %v80 = vld [vmem:[#allocation5 + $0x118] sm:$0xff]
    %v81 = vld [vmem:[#allocation5 + $0x120] sm:$0xff]
    %v82 = vld [vmem:[#allocation5 + $0x128] sm:$0xff]
    %v83 = vld [vmem:[#allocation5 + $0x130] sm:$0xff]
    %v84 = vld [vmem:[#allocation5 + $0x138] sm:$0xff]
    %v85 = vld [vmem:[#allocation5 + $0x140] sm:$0xff]
    %v86 = vld [vmem:[#allocation5 + $0x148] sm:$0xff]
    %v87 = vld [vmem:[#allocation5 + $0x150] sm:$0xff]
    %v88 = vld [vmem:[#allocation5 + $0x158] sm:$0xff]
    %v89 = vld [vmem:[#allocation5 + $0x160] sm:$0xff]
    %v90 = vld [vmem:[#allocation5 + $0x168] sm:$0xff]
    %v91 = vld [vmem:[#allocation5 + $0x170] sm:$0xff]
    %v92 = vld [vmem:[#allocation5 + $0x178] sm:$0xff]
    %v93 = vld [vmem:[%s2] sm:$0x7]
    %v95 = vlaneseq
    %v96 = vshrl.u32 %v95, 7
    %v97 = vsub.s32 0, %v96
    %v98 = vrot.slane %v93, %v97
    %v99 = vlaneseq
    %v100 = vshrl.u32 %v99, 7
    %v101 = vsub.s32 1, %v100
    %v102 = vrot.slane %v93, %v101
    %v103 = vlaneseq
    %v104 = vshrl.u32 %v103, 7
    %v105 = vsub.s32 2, %v104
    %v106 = vrot.slane %v93, %v105
    %110 = vmatprep.subr.mxu0 %v91
    %111 = vmatpush1.msra.mxu0 %v90
    %112 = vmatprep.subr.mxu0 %v88
    %113 = vmatpush1.msra.mxu0 %v87
    %114 = vmatprep.subr.mxu0 %v85
    %115 = vmatpush1.msra.mxu0 %v84
    %116 = vmatprep.subr.mxu0 %v82
    %117 = vmatpush1.msra.mxu0 %v81
    %118 = vmatprep.subr.mxu0 %v79
    %119 = vmatpush1.msra.mxu0 %v78
    %120 = vmatprep.subr.mxu0 %v76
    %121 = vmatpush1.msra.mxu0 %v75
    %122 = vmatprep.subr.mxu0 %v73
    %123 = vmatpush1.msra.mxu0 %v72
    %124 = vmatprep.subr.mxu0 %v70
    %125 = vmatpush1.msra.mxu0 %v69
    %126 = vmatprep.subr.mxu0 %v67
    %127 = vmatpush1.msra.mxu0 %v66
    %128 = vmatprep.subr.mxu0 %v64
    %129 = vmatpush1.msra.mxu0 %v63
    %130 = vmatprep.subr.mxu0 %v61
    %131 = vmatpush1.msra.mxu0 %v60
    %132 = vmatprep.subr.mxu0 %v58
    %133 = vmatpush1.msra.mxu0 %v57
    %134 = vmatprep.subr.mxu0 %v55
    %135 = vmatpush1.msra.mxu0 %v54
    %136 = vmatprep.subr.mxu0 %v52
    %137 = vmatpush1.msra.mxu0 %v51
    %138 = vmatprep.subr.mxu0 %v49
    %139 = vmatpush1.msra.mxu0 %v48
    %140 = vmatprep.subr.mxu0 %v46
    %141 = vmatpush1.msra.mxu0 %v45
    %142 = vmatprep.subr.mxu0 0.0
    %143 = vmatpush2.msra.mxu0 0.0
    %144 = vmatprep.subr.mxu0 0.0
    %145 = vmatpush2.msra.mxu0 0.0
    %146 = vmatprep.subr.mxu0 0.0
    %147 = vmatpush2.msra.mxu0 0.0
    %148 = vmatprep.subr.mxu0 0.0
    %149 = vmatpush2.msra.mxu0 0.0
    %150 = vmatprep.subr.mxu0 0.0
    %151 = vmatpush2.msra.mxu0 0.0
    %152 = vmatprep.subr.mxu0 0.0
    %153 = vmatpush2.msra.mxu0 0.0
    %154 = vmatprep.subr.mxu0 0.0
    %155 = vmatpush2.msra.mxu0 0.0
    %156 = vmatprep.subr.mxu0 0.0
    %157 = vmatpush2.msra.mxu0 0.0
    %158 = vmatprep.subr.mxu0 0.0
    %159 = vmatpush2.msra.mxu0 0.0
    %160 = vmatprep.subr.mxu0 0.0
    %161 = vmatpush2.msra.mxu0 0.0
    %162 = vmatprep.subr.mxu0 0.0
    %163 = vmatpush2.msra.mxu0 0.0
    %164 = vmatprep.subr.mxu0 0.0
    %165 = vmatpush2.msra.mxu0 0.0
    %166 = vmatprep.subr.mxu0 0.0
    %167 = vmatpush2.msra.mxu0 0.0
    %168 = vmatprep.subr.mxu0 0.0
    %169 = vmatpush2.msra.mxu0 0.0
    %170 = vmatprep.subr.mxu0 0.0
    %171 = vmatpush2.msra.mxu0 0.0
    %172 = vmatprep.subr.mxu0 0.0
    %173 = vmatpush2.msra.mxu0 0.0
    %174 = vmatprep.mubr.f32.mxu0 0.0
    %175 = vmatmul.mubr.f32.gmra.mxu0 %v43
    %v176 = vpop.f32.mrf.mxu0
    %v177 = vadd.f32 %v98, %v176
    %v178 = vpop.f32.mrf.mxu0
    %v179 = vadd.f32 %v102, %v178
    %180 = vmatprep.mubr.f32.mxu0 0.0
    %181 = vmatmul.mubr.f32.gmra.mxu0 %v44
    %v182 = vpop.f32.mrf.mxu0
    %v183 = vadd.f32 %v98, %v182
    %v184 = vpop.f32.mrf.mxu0
    %v185 = vadd.f32 %v102, %v184
    %186 = vdwg.mxu0
    %187 = vmatprep.subr.mxu0 0.0
    %188 = vmatpush1.msra.mxu0 %v92
    %189 = vmatprep.subr.mxu0 0.0
    %190 = vmatpush1.msra.mxu0 %v89
    %191 = vmatprep.subr.mxu0 0.0
    %192 = vmatpush1.msra.mxu0 %v86
    %193 = vmatprep.subr.mxu0 0.0
    %194 = vmatpush1.msra.mxu0 %v83
    %195 = vmatprep.subr.mxu0 0.0
    %196 = vmatpush1.msra.mxu0 %v80
    %197 = vmatprep.subr.mxu0 0.0
    %198 = vmatpush1.msra.mxu0 %v77
    %199 = vmatprep.subr.mxu0 0.0
    %200 = vmatpush1.msra.mxu0 %v74
    %201 = vmatprep.subr.mxu0 0.0
    %202 = vmatpush1.msra.mxu0 %v71
    %203 = vmatprep.subr.mxu0 0.0
    %204 = vmatpush1.msra.mxu0 %v68
    %205 = vmatprep.subr.mxu0 0.0
    %206 = vmatpush1.msra.mxu0 %v65
    %207 = vmatprep.subr.mxu0 0.0
    %208 = vmatpush1.msra.mxu0 %v62
    %209 = vmatprep.subr.mxu0 0.0
    %210 = vmatpush1.msra.mxu0 %v59
    %211 = vmatprep.subr.mxu0 0.0
    %212 = vmatpush1.msra.mxu0 %v56
    %213 = vmatprep.subr.mxu0 0.0
    %214 = vmatpush1.msra.mxu0 %v53
    %215 = vmatprep.subr.mxu0 0.0
    %216 = vmatpush1.msra.mxu0 %v50
    %217 = vmatprep.subr.mxu0 0.0
    %218 = vmatpush1.msra.mxu0 %v47
    %219 = vmatprep.subr.mxu0 0.0
    %220 = vmatpush2.msra.mxu0 0.0
    %221 = vmatprep.subr.mxu0 0.0
    %222 = vmatpush2.msra.mxu0 0.0
    %223 = vmatprep.subr.mxu0 0.0
    %224 = vmatpush2.msra.mxu0 0.0
    %225 = vmatprep.subr.mxu0 0.0
    %226 = vmatpush2.msra.mxu0 0.0
    %227 = vmatprep.subr.mxu0 0.0
    %228 = vmatpush2.msra.mxu0 0.0
    %229 = vmatprep.subr.mxu0 0.0
    %230 = vmatpush2.msra.mxu0 0.0
    %231 = vmatprep.subr.mxu0 0.0
    %232 = vmatpush2.msra.mxu0 0.0
    %233 = vmatprep.subr.mxu0 0.0
    %234 = vmatpush2.msra.mxu0 0.0
    %235 = vmatprep.subr.mxu0 0.0
    %236 = vmatpush2.msra.mxu0 0.0
    %237 = vmatprep.subr.mxu0 0.0
    %238 = vmatpush2.msra.mxu0 0.0
    %239 = vmatprep.subr.mxu0 0.0
    %240 = vmatpush2.msra.mxu0 0.0
    %241 = vmatprep.subr.mxu0 0.0
    %242 = vmatpush2.msra.mxu0 0.0
    %243 = vmatprep.subr.mxu0 0.0
    %244 = vmatpush2.msra.mxu0 0.0
    %245 = vmatprep.subr.mxu0 0.0
    %246 = vmatpush2.msra.mxu0 0.0
    %247 = vmatprep.subr.mxu0 0.0
    %248 = vmatpush2.msra.mxu0 0.0
    %249 = vmatprep.subr.mxu0 0.0
    %250 = vmatpush2.msra.mxu0 0.0
    %251 = vmatprep.mubr.f32.mxu0 0.0
    %252 = vmatmul.mubr.f32.gmra.mxu0 %v43
    %v253 = vpop.f32.mrf.mxu0
    %v254 = vadd.f32 %v106, %v253
    %v255 = vpop.f32.mrf.mxu0
    %256 = vmatprep.mubr.f32.mxu0 0.0
    %257 = vmatmul.mubr.f32.gmra.mxu0 %v44
    %v258 = vpop.f32.mrf.mxu0
    %v259 = vadd.f32 %v106, %v258
    %v260 = vpop.f32.mrf.mxu0
    %261 = vdwg.mxu0
    %262 = vmatprep.subr.mxu0 0.0
    %263 = vmatpush1.xpose.msra.mxu0 0.0
    %264 = vmatprep.subr.mxu0 0.0
    %265 = vmatpush1.xpose.msra.mxu0 0.0
    %266 = vmatprep.subr.mxu0 0.0
    %267 = vmatpush1.xpose.msra.mxu0 0.0
    %268 = vmatprep.subr.mxu0 0.0
    %269 = vmatpush1.xpose.msra.mxu0 0.0
    %270 = vmatprep.subr.mxu0 0.0
    %271 = vmatpush1.xpose.msra.mxu0 0.0
    %272 = vmatprep.subr.mxu0 0.0
    %273 = vmatpush1.xpose.msra.mxu0 0.0
    %274 = vmatprep.subr.mxu0 0.0
    %275 = vmatpush1.xpose.msra.mxu0 0.0
    %276 = vmatprep.subr.mxu0 0.0
    %277 = vmatpush1.xpose.msra.mxu0 0.0
    %278 = vmatprep.subr.mxu0 0.0
    %279 = vmatpush1.xpose.msra.mxu0 0.0
    %280 = vmatprep.subr.mxu0 0.0
    %281 = vmatpush1.xpose.msra.mxu0 0.0
    %282 = vmatprep.subr.mxu0 0.0
    %283 = vmatpush1.xpose.msra.mxu0 0.0
    %284 = vmatprep.subr.mxu0 0.0
    %285 = vmatpush1.xpose.msra.mxu0 0.0
    %286 = vmatprep.subr.mxu0 0.0
    %287 = vmatpush1.xpose.msra.mxu0 0.0
    %288 = vmatprep.subr.mxu0 0.0
    %289 = vmatpush1.xpose.msra.mxu0 0.0
    %290 = vmatprep.subr.mxu0 0.0
    %291 = vmatpush1.xpose.msra.mxu0 0.0
    %292 = vmatprep.subr.mxu0 0.0
    %293 = vmatpush1.xpose.msra.mxu0 %v179
    %294 = vmatprep.subr.mxu0 0.0
    %295 = vmatpush2.xpose.msra.mxu0 0.0
    %296 = vmatprep.subr.mxu0 0.0
    %297 = vmatpush2.xpose.msra.mxu0 0.0
    %298 = vmatprep.subr.mxu0 0.0
    %299 = vmatpush2.xpose.msra.mxu0 0.0
    %300 = vmatprep.subr.mxu0 0.0
    %301 = vmatpush2.xpose.msra.mxu0 0.0
    %302 = vmatprep.subr.mxu0 0.0
    %303 = vmatpush2.xpose.msra.mxu0 0.0
    %304 = vmatprep.subr.mxu0 0.0
    %305 = vmatpush2.xpose.msra.mxu0 0.0
    %306 = vmatprep.subr.mxu0 0.0
    %307 = vmatpush2.xpose.msra.mxu0 0.0
    %308 = vmatprep.subr.mxu0 0.0
    %309 = vmatpush2.xpose.msra.mxu0 0.0
    %310 = vmatprep.subr.mxu0 0.0
    %311 = vmatpush2.xpose.msra.mxu0 0.0
    %312 = vmatprep.subr.mxu0 0.0
    %313 = vmatpush2.xpose.msra.mxu0 0.0
    %314 = vmatprep.subr.mxu0 0.0
    %315 = vmatpush2.xpose.msra.mxu0 0.0
    %316 = vmatprep.subr.mxu0 0.0
    %317 = vmatpush2.xpose.msra.mxu0 0.0
    %318 = vmatprep.subr.mxu0 0.0
    %319 = vmatpush2.xpose.msra.mxu0 0.0
    %320 = vmatprep.subr.mxu0 0.0
    %321 = vmatpush2.xpose.msra.mxu0 0.0
    %322 = vmatprep.subr.mxu0 0.0
    %323 = vmatpush2.xpose.msra.mxu0 0.0
    %324 = vmatprep.subr.mxu0 0.0
    %325 = vmatpush2.xpose.msra.mxu0 0.0
    %326 = vmatprep.mubr.f32.mxu0 0.0
    %327 = vmatmul.mubr.f32.gmra.mxu0 %v177
    %v328 = vpop.f32.mrf.mxu0
    %v329 = vadd.f32 0.0, %v328
    %v330 = vpop.f32.mrf.mxu0
    %331 = vdwg.mxu0
    %332 = vmatprep.subr.mxu0 0.0
    %333 = vmatpush1.xpose.msra.mxu0 0.0
    %334 = vmatprep.subr.mxu0 0.0
    %335 = vmatpush1.xpose.msra.mxu0 0.0
    %336 = vmatprep.subr.mxu0 0.0
    %337 = vmatpush1.xpose.msra.mxu0 0.0
    %338 = vmatprep.subr.mxu0 0.0
    %339 = vmatpush1.xpose.msra.mxu0 0.0
    %340 = vmatprep.subr.mxu0 0.0
    %341 = vmatpush1.xpose.msra.mxu0 0.0
    %342 = vmatprep.subr.mxu0 0.0
    %343 = vmatpush1.xpose.msra.mxu0 0.0
    %344 = vmatprep.subr.mxu0 0.0
    %345 = vmatpush1.xpose.msra.mxu0 0.0
    %346 = vmatprep.subr.mxu0 0.0
    %347 = vmatpush1.xpose.msra.mxu0 0.0
    %348 = vmatprep.subr.mxu0 0.0
    %349 = vmatpush1.xpose.msra.mxu0 0.0
    %350 = vmatprep.subr.mxu0 0.0
    %351 = vmatpush1.xpose.msra.mxu0 0.0
    %352 = vmatprep.subr.mxu0 0.0
    %353 = vmatpush1.xpose.msra.mxu0 0.0
    %354 = vmatprep.subr.mxu0 0.0
    %355 = vmatpush1.xpose.msra.mxu0 0.0
    %356 = vmatprep.subr.mxu0 0.0
    %357 = vmatpush1.xpose.msra.mxu0 0.0
    %358 = vmatprep.subr.mxu0 0.0
    %359 = vmatpush1.xpose.msra.mxu0 0.0
    %360 = vmatprep.subr.mxu0 0.0
    %361 = vmatpush1.xpose.msra.mxu0 0.0
    %362 = vmatprep.subr.mxu0 0.0
    %363 = vmatpush1.xpose.msra.mxu0 %v185
    %364 = vmatprep.subr.mxu0 0.0
    %365 = vmatpush2.xpose.msra.mxu0 0.0
    %366 = vmatprep.subr.mxu0 0.0
    %367 = vmatpush2.xpose.msra.mxu0 0.0
    %368 = vmatprep.subr.mxu0 0.0
    %369 = vmatpush2.xpose.msra.mxu0 0.0
    %370 = vmatprep.subr.mxu0 0.0
    %371 = vmatpush2.xpose.msra.mxu0 0.0
    %372 = vmatprep.subr.mxu0 0.0
    %373 = vmatpush2.xpose.msra.mxu0 0.0
    %374 = vmatprep.subr.mxu0 0.0
    %375 = vmatpush2.xpose.msra.mxu0 0.0
    %376 = vmatprep.subr.mxu0 0.0
    %377 = vmatpush2.xpose.msra.mxu0 0.0
    %378 = vmatprep.subr.mxu0 0.0
    %379 = vmatpush2.xpose.msra.mxu0 0.0
    %380 = vmatprep.subr.mxu0 0.0
    %381 = vmatpush2.xpose.msra.mxu0 0.0
    %382 = vmatprep.subr.mxu0 0.0
    %383 = vmatpush2.xpose.msra.mxu0 0.0
    %384 = vmatprep.subr.mxu0 0.0
    %385 = vmatpush2.xpose.msra.mxu0 0.0
    %386 = vmatprep.subr.mxu0 0.0
    %387 = vmatpush2.xpose.msra.mxu0 0.0
    %388 = vmatprep.subr.mxu0 0.0
    %389 = vmatpush2.xpose.msra.mxu0 0.0
    %390 = vmatprep.subr.mxu0 0.0
    %391 = vmatpush2.xpose.msra.mxu0 0.0
    %392 = vmatprep.subr.mxu0 0.0
    %393 = vmatpush2.xpose.msra.mxu0 0.0
    %394 = vmatprep.subr.mxu0 0.0
    %395 = vmatpush2.xpose.msra.mxu0 0.0
    %396 = vmatprep.mubr.f32.mxu0 0.0
    %397 = vmatmul.mubr.f32.gmra.mxu0 %v183
    %v398 = vpop.f32.mrf.mxu0
    %v399 = vadd.f32 0.0, %v398
    %v400 = vpop.f32.mrf.mxu0
    %401 = vdwg.mxu0
    %vm402 = vcmask 64512
    %v403 = vsel %vm402, %v329, -inf
    %v404 = vrot.slane %v403, 4
    %v405 = vmax.f32 %v403, %v404
    %v406 = vrot.slane %v405, 2
    %v407 = vmax.f32 %v405, %v406
    %v408 = vrot.slane %v407, 1
    %v409 = vmax.f32 %v407, %v408
    %v410 = vsel %vm402, %v399, -inf
    %v411 = vrot.slane %v410, 4
    %v412 = vmax.f32 %v410, %v411
    %v413 = vrot.slane %v412, 2
    %v414 = vmax.f32 %v412, %v413
    %v415 = vrot.slane %v414, 1
    %v416 = vmax.f32 %v414, %v415
    %v417 = vsub.f32 %v329, %v409
    %v418 = vsub.f32 %v399, %v416
    %v419 = vmul.f32 %v417, 1.442695
    %v420 = vpow.pop %v419
    %v421 = vmul.f32 %v418, 1.442695
    %v422 = vpow.pop %v421
    %v423 = vsel %vm402, %v420, 0.0
    %v424 = vrot.slane %v423, 4
    %v425 = vadd.f32 %v423, %v424
    %v426 = vrot.slane %v425, 2
    %v427 = vadd.f32 %v425, %v426
    %v428 = vrot.slane %v427, 1
    %v429 = vadd.f32 %v427, %v428
    %v430 = vsel %vm402, %v422, 0.0
    %v431 = vrot.slane %v430, 4
    %v432 = vadd.f32 %v430, %v431
    %v433 = vrot.slane %v432, 2
    %v434 = vadd.f32 %v432, %v433
    %v435 = vrot.slane %v434, 1
    %v436 = vadd.f32 %v434, %v435
    %v437 = vrcp.pop %v429
    %v438 = vrcp.pop %v436
    %v439 = vmul.f32 %v420, %v437
    %v440 = vmul.f32 %v422, %v438
    %v442 = vsel %vm402, %v439, 0
    %444 = vmatprep.subr.mxu0 0.0
    %445 = vmatpush1.msra.mxu0 0.0
    %446 = vmatprep.subr.mxu0 0.0
    %447 = vmatpush1.msra.mxu0 0.0
    %448 = vmatprep.subr.mxu0 0.0
    %449 = vmatpush1.msra.mxu0 0.0
    %450 = vmatprep.subr.mxu0 0.0
    %451 = vmatpush1.msra.mxu0 0.0
    %452 = vmatprep.subr.mxu0 0.0
    %453 = vmatpush1.msra.mxu0 0.0
    %454 = vmatprep.subr.mxu0 0.0
    %455 = vmatpush1.msra.mxu0 0.0
    %456 = vmatprep.subr.mxu0 0.0
    %457 = vmatpush1.msra.mxu0 0.0
    %458 = vmatprep.subr.mxu0 0.0
    %459 = vmatpush1.msra.mxu0 0.0
    %460 = vmatprep.subr.mxu0 0.0
    %461 = vmatpush1.msra.mxu0 0.0
    %462 = vmatprep.subr.mxu0 0.0
    %463 = vmatpush1.msra.mxu0 0.0
    %464 = vmatprep.subr.mxu0 0.0
    %465 = vmatpush1.msra.mxu0 0.0
    %466 = vmatprep.subr.mxu0 0.0
    %467 = vmatpush1.msra.mxu0 0.0
    %468 = vmatprep.subr.mxu0 0.0
    %469 = vmatpush1.msra.mxu0 0.0
    %470 = vmatprep.subr.mxu0 0.0
    %471 = vmatpush1.msra.mxu0 0.0
    %472 = vmatprep.subr.mxu0 0.0
    %473 = vmatpush1.msra.mxu0 0.0
    %474 = vmatprep.subr.mxu0 0.0
    %475 = vmatpush1.msra.mxu0 %v254
    %476 = vmatprep.subr.mxu0 0.0
    %477 = vmatpush2.msra.mxu0 0.0
    %478 = vmatprep.subr.mxu0 0.0
    %479 = vmatpush2.msra.mxu0 0.0
    %480 = vmatprep.subr.mxu0 0.0
    %481 = vmatpush2.msra.mxu0 0.0
    %482 = vmatprep.subr.mxu0 0.0
    %483 = vmatpush2.msra.mxu0 0.0
    %484 = vmatprep.subr.mxu0 0.0
    %485 = vmatpush2.msra.mxu0 0.0
    %486 = vmatprep.subr.mxu0 0.0
    %487 = vmatpush2.msra.mxu0 0.0
    %488 = vmatprep.subr.mxu0 0.0
    %489 = vmatpush2.msra.mxu0 0.0
    %490 = vmatprep.subr.mxu0 0.0
    %491 = vmatpush2.msra.mxu0 0.0
    %492 = vmatprep.subr.mxu0 0.0
    %493 = vmatpush2.msra.mxu0 0.0
    %494 = vmatprep.subr.mxu0 0.0
    %495 = vmatpush2.msra.mxu0 0.0
    %496 = vmatprep.subr.mxu0 0.0
    %497 = vmatpush2.msra.mxu0 0.0
    %498 = vmatprep.subr.mxu0 0.0
    %499 = vmatpush2.msra.mxu0 0.0
    %500 = vmatprep.subr.mxu0 0.0
    %501 = vmatpush2.msra.mxu0 0.0
    %502 = vmatprep.subr.mxu0 0.0
    %503 = vmatpush2.msra.mxu0 0.0
    %504 = vmatprep.subr.mxu0 0.0
    %505 = vmatpush2.msra.mxu0 0.0
    %506 = vmatprep.subr.mxu0 0.0
    %507 = vmatpush2.msra.mxu0 0.0
    %508 = vmatprep.mubr.f32.mxu0 0.0
    %509 = vmatmul.mubr.f32.gmra.mxu0 %v442
    %v510 = vpop.f32.mrf.mxu0
    %v511 = vadd.f32 0.0, %v510
    %v512 = vpop.f32.mrf.mxu0
    %513 = vdwg.mxu0
    %v515 = vsel %vm402, %v440, 0
    %517 = vmatprep.subr.mxu0 0.0
    %518 = vmatpush1.msra.mxu0 0.0
    %519 = vmatprep.subr.mxu0 0.0
    %520 = vmatpush1.msra.mxu0 0.0
    %521 = vmatprep.subr.mxu0 0.0
    %522 = vmatpush1.msra.mxu0 0.0
    %523 = vmatprep.subr.mxu0 0.0
    %524 = vmatpush1.msra.mxu0 0.0
    %525 = vmatprep.subr.mxu0 0.0
    %526 = vmatpush1.msra.mxu0 0.0
    %527 = vmatprep.subr.mxu0 0.0
    %528 = vmatpush1.msra.mxu0 0.0
    %529 = vmatprep.subr.mxu0 0.0
    %530 = vmatpush1.msra.mxu0 0.0
    %531 = vmatprep.subr.mxu0 0.0
    %532 = vmatpush1.msra.mxu0 0.0
    %533 = vmatprep.subr.mxu0 0.0
    %534 = vmatpush1.msra.mxu0 0.0
    %535 = vmatprep.subr.mxu0 0.0
    %536 = vmatpush1.msra.mxu0 0.0
    %537 = vmatprep.subr.mxu0 0.0
    %538 = vmatpush1.msra.mxu0 0.0
    %539 = vmatprep.subr.mxu0 0.0
    %540 = vmatpush1.msra.mxu0 0.0
    %541 = vmatprep.subr.mxu0 0.0
    %542 = vmatpush1.msra.mxu0 0.0
    %543 = vmatprep.subr.mxu0 0.0
    %544 = vmatpush1.msra.mxu0 0.0
    %545 = vmatprep.subr.mxu0 0.0
    %546 = vmatpush1.msra.mxu0 0.0
    %547 = vmatprep.subr.mxu0 0.0
    %548 = vmatpush1.msra.mxu0 %v259
    %549 = vmatprep.subr.mxu0 0.0
    %550 = vmatpush2.msra.mxu0 0.0
    %551 = vmatprep.subr.mxu0 0.0
    %552 = vmatpush2.msra.mxu0 0.0
    %553 = vmatprep.subr.mxu0 0.0
    %554 = vmatpush2.msra.mxu0 0.0
    %555 = vmatprep.subr.mxu0 0.0
    %556 = vmatpush2.msra.mxu0 0.0
    %557 = vmatprep.subr.mxu0 0.0
    %558 = vmatpush2.msra.mxu0 0.0
    %559 = vmatprep.subr.mxu0 0.0
    %560 = vmatpush2.msra.mxu0 0.0
    %561 = vmatprep.subr.mxu0 0.0
    %562 = vmatpush2.msra.mxu0 0.0
    %563 = vmatprep.subr.mxu0 0.0
    %564 = vmatpush2.msra.mxu0 0.0
    %565 = vmatprep.subr.mxu0 0.0
    %566 = vmatpush2.msra.mxu0 0.0
    %567 = vmatprep.subr.mxu0 0.0
    %568 = vmatpush2.msra.mxu0 0.0
    %569 = vmatprep.subr.mxu0 0.0
    %570 = vmatpush2.msra.mxu0 0.0
    %571 = vmatprep.subr.mxu0 0.0
    %572 = vmatpush2.msra.mxu0 0.0
    %573 = vmatprep.subr.mxu0 0.0
    %574 = vmatpush2.msra.mxu0 0.0
    %575 = vmatprep.subr.mxu0 0.0
    %576 = vmatpush2.msra.mxu0 0.0
    %577 = vmatprep.subr.mxu0 0.0
    %578 = vmatpush2.msra.mxu0 0.0
    %579 = vmatprep.subr.mxu0 0.0
    %580 = vmatpush2.msra.mxu0 0.0
    %581 = vmatprep.mubr.f32.mxu0 0.0
    %582 = vmatmul.mubr.f32.gmra.mxu0 %v515
    %v583 = vpop.f32.mrf.mxu0
    %v584 = vadd.f32 0.0, %v583
    %v585 = vpop.f32.mrf.mxu0
    %586 = vdwg.mxu0
    %587 = vst [vmem:[#allocation7] sm:$0xff] %v511
    %588 = vst [vmem:[#allocation7 + $0x8] sm:$0xff] %v584
    // Predicated region
    $region22: #{tpu_custom_call.1} parent=1 // pred_check
      _
    $region23: #{tpu_custom_call.1} parent=1 // pred_check_branch
      %590 = sbr.rel (0) target = $region25
    $region24: #{tpu_custom_call.1} parent=1 // pred_region
      %s592 = ssub.s32 256, 256
      %593 = vsyncadd [#allocation4], %s592
      %s594 = sshll.u32 [#allocation7], 4
      %s595 = int_to_ptr.vmem [resolvable:$true] %s594
      %600 = dma.vmem_to_hbm [thread:$0]  %s595, 256, %s3, [#allocation4], 128, 128, 8
    $region25: #{tpu_custom_call.1} parent=1 // pred_fallthru
      _
    // Predicated region
    $region26: #{tpu_custom_call.1} parent=1 // pred_check
      _
    $region27: #{tpu_custom_call.1} parent=1 // pred_check_branch
      %602 = sbr.rel (0) target = $region29
    $region28: #{tpu_custom_call.1} parent=1 // pred_region
      %603 = dma.done [#allocation4], 256
    $region29: #{tpu_custom_call.1} parent=1 // pred_fallthru
      _
    %604 = vsyncpa [#allocation3], 1
    %605 = vsyncpa [#allocation6], 1
    %606 = vsyncpa [#allocation4], 1

</llo_original>
